<compile_context>
chip_gen: v5e
topology: v5e:2x2
jax: 0.10.0
libtpu: 0.0.40
codegen_flags: <defaults>
</compile_context>

<pallas_src>
import math
import numpy as np
import jax
import jax.numpy as jnp
from jax import lax
from jax.experimental import pallas as pl
from jax.experimental.pallas import tpu as pltpu

# ----------------------------- model hyper-params (small demo) --------------------
NUM_CLASSES = 4        # C
INPUT_DIM = 16         # D
HIDDEN_DIM = 128       # hidden_dim (8192 in the original; lane-dense demo size)
NUM_LAYERS = 5
T_LIMIT = 1.0
TIME_EMBED_STD = 30.0
TIME_EMBED_SIZE = 32   # T (must be even)
LABEL_EMBED_SIZE = 32  # E
BATCH = 8              # B (f32 sublane multiple; >1 so training-mode BN is defined)
BN_EPS = 1e-5


# ----------------------------------- Pallas kernel --------------------------------
def make_kernel(num_layers, t_limit, dims, rows):
    D, H, T, C, E = dims["D"], dims["H"], dims["T"], dims["C"], dims["E"]
    n_mid = num_layers - 2
    ROW_EMB, ROW_TW, ROW_TEB, ROW_B, ROW_G, ROW_BE = rows

    def kernel(xt_ref, t_ref, lab_ref, vec_ref, te_w_ref, w0_ref, w_mid_ref,
               w_last_ref, out_ref):
        f32 = jnp.float32
        B = xt_ref.shape[0]

        def vrow(row, width):
            # static slice of the packed vector slab -> (1, width), free
            return vec_ref[row:row + 1, :width]

        # ---- time embedding: swish(concat([sin, cos])), computed exactly once ----
        t = t_ref[...]                                         # (B, 1)
        tw = vrow(ROW_TW, T // 2)                              # (1, T/2)
        args = (t * (1.0 / t_limit)) * tw * (math.pi / 2.0)    # (B, T/2)
        te_raw = jnp.concatenate([jnp.sin(args), jnp.cos(args)], axis=1)   # (B, T)
        time_embed = te_raw * jax.nn.sigmoid(te_raw)           # swish, (B, T)

        # ---- label embedding: one-hot (B, C) @ table (C, E) on the MXU -----------
        ids = lax.broadcasted_iota(jnp.int32, (B, C), 1)
        onehot = (ids == lab_ref[...]).astype(f32)             # (B, C)
        emb_tab = vec_ref[ROW_EMB:ROW_EMB + C, :E]             # (C, E)
        label_embed = jnp.dot(onehot, emb_tab, preferred_element_type=f32)  # (B, E)

        # ---- all time-embedders in ONE matmul: (B,T) @ (T, (L-1)*H) --------------
        te_all = jnp.dot(time_embed, te_w_ref[...], preferred_element_type=f32)

        # ---- training-mode BatchNorm1d + ReLU (single-pass batch statistics) -----
        def bn_relu(z, gamma, beta):
            mean = jnp.mean(z, axis=0, keepdims=True)
            mean_sq = jnp.mean(z * z, axis=0, keepdims=True)
            var = jnp.maximum(mean_sq - mean * mean, 0.0)
            zn = (z - mean) * lax.rsqrt(var + BN_EPS)
            return jnp.maximum(zn * gamma + beta, 0.0)

        # ---- layer 0: concat([x + te0, label_embed]) via sublane-split weight ----
        te0 = te_all[:, :D] + vrow(ROW_TEB, D)                 # (B, D)
        z = (jnp.dot(xt_ref[...] + te0, w0_ref[:D, :], preferred_element_type=f32)
             + jnp.dot(label_embed, w0_ref[D:D + E, :], preferred_element_type=f32)
             + vrow(ROW_B, H))
        running = bn_relu(z, vrow(ROW_G, H), vrow(ROW_BE, H))  # (B, H)

        # ---- middle residual layers (lane-block-aligned te slices) ----------------
        for i in range(n_mid):
            te = te_all[:, (1 + i) * H:(2 + i) * H] + vrow(ROW_TEB + 1 + i, H)
            z = (jnp.dot(running + te, w_mid_ref[i], preferred_element_type=f32)
                 + vrow(ROW_B + 1 + i, H))
            running = running + bn_relu(z, vrow(ROW_G + 1 + i, H),
                                        vrow(ROW_BE + 1 + i, H))

        # ---- final linear (no BN / ReLU) ------------------------------------------
        out_ref[...] = (jnp.dot(running, w_last_ref[...], preferred_element_type=f32)
                        + vrow(ROW_B + num_layers - 1, D))

    return kernel


# -------------------------------- parameter init -----------------------------------
def init_params(key):
    keys = list(jax.random.split(key, 64))
    ki = iter(keys)
    tw = jax.random.normal(next(ki), (TIME_EMBED_SIZE // 2,), jnp.float32) * TIME_EMBED_STD
    emb = jax.random.normal(next(ki), (NUM_CLASSES, LABEL_EMBED_SIZE), jnp.float32)
    te_params = []      # list of (W_te (T, in), b_te (in,))
    layer_params = []   # list of (W (in, out), b (out,), [gamma, beta])
    for i in range(NUM_LAYERS):
        if i == 0:
            in_size, out_size = INPUT_DIM, HIDDEN_DIM
        elif i < NUM_LAYERS - 1:
            in_size, out_size = HIDDEN_DIM, HIDDEN_DIM
        else:
            in_size, out_size = HIDDEN_DIM, INPUT_DIM
        dense_in = in_size + LABEL_EMBED_SIZE if i == 0 else in_size
        w = jax.random.normal(next(ki), (dense_in, out_size), jnp.float32) / np.sqrt(dense_in)
        b = jax.random.normal(next(ki), (out_size,), jnp.float32) * 0.01
        if i < NUM_LAYERS - 1:
            gamma = jnp.ones((out_size,), jnp.float32)
            beta = jnp.zeros((out_size,), jnp.float32)
            layer_params.append((w, b, gamma, beta))
            te_w = (jax.random.normal(next(ki), (TIME_EMBED_SIZE, in_size), jnp.float32)
                    / np.sqrt(TIME_EMBED_SIZE))
            te_b = jax.random.normal(next(ki), (in_size,), jnp.float32) * 0.01
            te_params.append((te_w, te_b))
        else:
            layer_params.append((w, b))
    return tw, emb, te_params, layer_params


# ------------------------------ small-parameter packing -----------------------------
def pack_vectors(emb, tw, te_params, layer_params, maxw):
    def pad(v):
        v = np.asarray(v, dtype=np.float32).reshape(-1)
        row = np.zeros((maxw,), np.float32)
        row[: v.shape[0]] = v
        return row
    emb_np = np.asarray(emb, dtype=np.float32)
    rows = [pad(emb_np[c]) for c in range(emb_np.shape[0])]     # ROW_EMB .. +C-1
    rows += [pad(tw)]                                           # ROW_TW
    rows += [pad(te_b) for (_, te_b) in te_params]              # ROW_TEB .. +(L-2)
    rows += [pad(lp[1]) for lp in layer_params]                 # ROW_B   .. +(L-1)
    rows += [pad(lp[2]) for lp in layer_params[:-1]]            # ROW_G
    rows += [pad(lp[3]) for lp in layer_params[:-1]]            # ROW_BE
    return jnp.asarray(np.stack(rows, axis=0))


def pack_te_weights(te_params, D, H, T, num_layers):
    # (T, (num_layers-1)*H): layer-0 embedder zero-padded into the first 128-block,
    # mid-layer embedders occupy lane-aligned 128-wide blocks.
    te_w_all = np.zeros((T, (num_layers - 1) * H), np.float32)
    te_w_all[:, :D] = np.asarray(te_params[0][0], np.float32)
    for i in range(num_layers - 2):
        te_w_all[:, (1 + i) * H:(2 + i) * H] = np.asarray(te_params[1 + i][0], np.float32)
    return jnp.asarray(te_w_all)


# ----------------------------------- wrapper ----------------------------------------
def label_guided_resnet_forward(xt, t, label, tw, emb, te_params, layer_params):
    B, D = xt.shape
    H, T, C, E = HIDDEN_DIM, TIME_EMBED_SIZE, NUM_CLASSES, LABEL_EMBED_SIZE
    n_mid = NUM_LAYERS - 2
    maxw = max(H, D, T // 2, E)

    vec_slab = pack_vectors(emb, tw, te_params, layer_params, maxw)   # (C+17, maxw)
    te_w_all = pack_te_weights(te_params, D, H, T, NUM_LAYERS)        # (T, (L-1)*H)

    w0 = layer_params[0][0]                                           # (D+E, H), full concat weight
    w_mid = jnp.stack([layer_params[1 + i][0] for i in range(n_mid)], 0)   # (n_mid, H, H)
    w_last = layer_params[-1][0]                                      # (H, D)

    ROW_EMB = 0
    ROW_TW = ROW_EMB + C
    ROW_TEB = ROW_TW + 1
    ROW_B = ROW_TEB + (NUM_LAYERS - 1)
    ROW_G = ROW_B + NUM_LAYERS
    ROW_BE = ROW_G + (NUM_LAYERS - 1)
    rows = (ROW_EMB, ROW_TW, ROW_TEB, ROW_B, ROW_G, ROW_BE)

    kernel = make_kernel(NUM_LAYERS, T_LIMIT,
                         dict(D=D, H=H, T=T, C=C, E=E), rows)

    inputs = [
        xt.astype(jnp.float32),                     # (B, D)
        t.reshape(B, 1).astype(jnp.float32),        # (B, 1)
        label.reshape(B, 1).astype(jnp.int32),      # (B, 1)
        vec_slab,                                   # (C+17, maxw) packed small params
        te_w_all,                                   # (T, (L-1)*H) fused time embedders
        w0.astype(jnp.float32),                     # (D+E, H)
        w_mid.astype(jnp.float32),                  # (n_mid, H, H)
        w_last.astype(jnp.float32),                 # (H, D)
    ]

    return pl.pallas_call(
        kernel,
        out_shape=jax.ShapeDtypeStruct((B, D), jnp.float32),
        in_specs=[pl.BlockSpec(memory_space=pltpu.MemorySpace.VMEM)] * len(inputs),
        out_specs=pl.BlockSpec(memory_space=pltpu.MemorySpace.VMEM),
    )(*inputs)


# ------------------------------ pure-JAX reference ----------------------------------
def reference_forward(xt, t, label, tw, emb, te_params, layer_params):
    args = t[:, None] / T_LIMIT * tw[None, :] * (np.pi / 2)
    cat = jnp.concatenate([jnp.sin(args), jnp.cos(args)], axis=1)
    time_embed = cat * jax.nn.sigmoid(cat)
    label_embed = emb[label]

    def bn_relu(z, g, be):
        m = jnp.mean(z, axis=0, keepdims=True)
        v = jnp.mean(jnp.square(z - m), axis=0, keepdims=True)
        return jnp.maximum((z - m) / jnp.sqrt(v + BN_EPS) * g + be, 0.0)

    out = None
    running = None
    for i in range(NUM_LAYERS):
        if i == 0:
            te_w, te_b = te_params[0]
            h = jnp.concatenate([xt + time_embed @ te_w + te_b, label_embed], axis=1)
            w, b, g, be = layer_params[0]
            running = bn_relu(h @ w + b, g, be)
        elif i < NUM_LAYERS - 1:
            te_w, te_b = te_params[i]
            w, b, g, be = layer_params[i]
            lo = bn_relu((running + time_embed @ te_w + te_b) @ w + b, g, be)
            running = running + lo
        else:
            w, b = layer_params[i]
            out = running @ w + b
    return out


# ------------------------------------- main -----------------------------------------
if __name__ == "__main__":
    key = jax.random.PRNGKey(0)
    k_xt, k_t, k_lab, k_par = jax.random.split(key, 4)

    xt = jax.random.normal(k_xt, (BATCH, INPUT_DIM), jnp.float32)
    t = jax.random.uniform(k_t, (BATCH,), jnp.float32, minval=0.0, maxval=T_LIMIT)
    label = jax.random.randint(k_lab, (BATCH,), 0, NUM_CLASSES, jnp.int32)

    tw, emb, te_params, layer_params = init_params(k_par)

    out = label_guided_resnet_forward(xt, t, label, tw, emb, te_params, layer_params)
    out = jax.block_until_ready(out)

    ref = reference_forward(xt, t, label, tw, emb, te_params, layer_params)
    np.testing.assert_allclose(np.asarray(out), np.asarray(ref), rtol=1e-4, atol=1e-4)

    print("KERNEL_OK")
</pallas_src>

<mosaic_0001>
module attributes {stable_mosaic.version = 11 : i64} {
  func.func @kernel(%arg0: memref<8x16xf32, #tpu.memory_space<vmem>>, %arg1: memref<8x1xf32, #tpu.memory_space<vmem>>, %arg2: memref<8x1xi32, #tpu.memory_space<vmem>>, %arg3: memref<22x128xf32, #tpu.memory_space<vmem>>, %arg4: memref<32x512xf32, #tpu.memory_space<vmem>>, %arg5: memref<48x128xf32, #tpu.memory_space<vmem>>, %arg6: memref<3x128x128xf32, #tpu.memory_space<vmem>>, %arg7: memref<128x16xf32, #tpu.memory_space<vmem>>, %arg8: memref<8x16xf32, #tpu.memory_space<vmem>>) attributes {dimension_semantics = [], scalar_prefetch = 0 : i64, scratch_operands = 0 : i64, tpu.core_type = #tpu.core_type<tc>} {
    %c0 = arith.constant 0 : index
    %c0_0 = arith.constant 0 : index
    %0 = vector.load %arg1[%c0, %c0_0] : memref<8x1xf32, #tpu.memory_space<vmem>>, vector<8x1xf32>
    %c4 = arith.constant 4 : index
    %c0_1 = arith.constant 0 : index
    %1 = vector.load %arg3[%c4, %c0_1] : memref<22x128xf32, #tpu.memory_space<vmem>>, vector<1x16xf32>
    %cst = arith.constant 1.000000e+00 : f32
    %2 = vector.broadcast %cst : f32 to vector<8x1xf32>
    %3 = arith.mulf %0, %2 : vector<8x1xf32>
    %4 = vector.broadcast %3 : vector<8x1xf32> to vector<8x16xf32>
    %5 = vector.broadcast %1 : vector<1x16xf32> to vector<8x16xf32>
    %6 = arith.mulf %4, %5 : vector<8x16xf32>
    %cst_2 = arith.constant 1.57079637 : f32
    %7 = vector.broadcast %cst_2 : f32 to vector<8x16xf32>
    %8 = arith.mulf %6, %7 : vector<8x16xf32>
    %9 = math.sin %8 : vector<8x16xf32>
    %10 = math.cos %8 : vector<8x16xf32>
    %11 = tpu.concatenate %9, %10 in 1 : vector<8x16xf32>, vector<8x16xf32> -> vector<8x32xf32>
    %12 = arith.negf %11 : vector<8x32xf32>
    %13 = math.exp %12 : vector<8x32xf32>
    %cst_3 = arith.constant 1.000000e+00 : f32
    %14 = vector.broadcast %cst_3 : f32 to vector<8x32xf32>
    %15 = arith.addf %14, %13 : vector<8x32xf32>
    %16 = arith.divf %14, %15 : vector<8x32xf32>
    %17 = arith.mulf %11, %16 : vector<8x32xf32>
    %18 = tpu.iota {dimensions = array<i32: 1>} : vector<8x4xi32>
    %c0_4 = arith.constant 0 : index
    %c0_5 = arith.constant 0 : index
    %19 = vector.load %arg2[%c0_4, %c0_5] : memref<8x1xi32, #tpu.memory_space<vmem>>, vector<8x1xi32>
    %20 = vector.broadcast %19 : vector<8x1xi32> to vector<8x4xi32>
    %21 = arith.cmpi eq, %18, %20 : vector<8x4xi32>
    %22 = arith.extui %21 : vector<8x4xi1> to vector<8x4xi32>
    %23 = arith.sitofp %22 : vector<8x4xi32> to vector<8x4xf32>
    %c0_6 = arith.constant 0 : index
    %c0_7 = arith.constant 0 : index
    %24 = vector.load %arg3[%c0_6, %c0_7] : memref<22x128xf32, #tpu.memory_space<vmem>>, vector<4x32xf32>
    %cst_8 = arith.constant dense<0.000000e+00> : vector<8x32xf32>
    %25 = tpu.matmul %23, %24, %cst_8 {dimension_numbers = #tpu.dot_dimension_numbers<[1], [0], [0], [1], [0, 0, 1, 1], [], []>} : vector<8x4xf32>, vector<4x32xf32>, vector<8x32xf32> -> vector<8x32xf32>
    %c0_9 = arith.constant 0 : index
    %c0_10 = arith.constant 0 : index
    %26 = vector.load %arg4[%c0_9, %c0_10] : memref<32x512xf32, #tpu.memory_space<vmem>>, vector<32x512xf32>
    %cst_11 = arith.constant dense<0.000000e+00> : vector<8x512xf32>
    %27 = tpu.matmul %17, %26, %cst_11 {dimension_numbers = #tpu.dot_dimension_numbers<[1], [0], [0], [1], [0, 0, 1, 1], [], []>} : vector<8x32xf32>, vector<32x512xf32>, vector<8x512xf32> -> vector<8x512xf32>
    %28 = vector.extract_strided_slice %27 {offsets = [0, 0], sizes = [8, 16], strides = [1, 1]} : vector<8x512xf32> to vector<8x16xf32>
    %c5 = arith.constant 5 : index
    %c0_12 = arith.constant 0 : index
    %29 = vector.load %arg3[%c5, %c0_12] : memref<22x128xf32, #tpu.memory_space<vmem>>, vector<1x16xf32>
    %30 = vector.broadcast %29 : vector<1x16xf32> to vector<8x16xf32>
    %31 = arith.addf %28, %30 : vector<8x16xf32>
    %c0_13 = arith.constant 0 : index
    %c0_14 = arith.constant 0 : index
    %32 = vector.load %arg0[%c0_13, %c0_14] : memref<8x16xf32, #tpu.memory_space<vmem>>, vector<8x16xf32>
    %33 = arith.addf %32, %31 : vector<8x16xf32>
    %c0_15 = arith.constant 0 : index
    %c0_16 = arith.constant 0 : index
    %34 = vector.load %arg5[%c0_15, %c0_16] : memref<48x128xf32, #tpu.memory_space<vmem>>, vector<16x128xf32>
    %cst_17 = arith.constant dense<0.000000e+00> : vector<8x128xf32>
    %35 = tpu.matmul %33, %34, %cst_17 {dimension_numbers = #tpu.dot_dimension_numbers<[1], [0], [0], [1], [0, 0, 1, 1], [], []>} : vector<8x16xf32>, vector<16x128xf32>, vector<8x128xf32> -> vector<8x128xf32>
    %c16 = arith.constant 16 : index
    %c0_18 = arith.constant 0 : index
    %36 = vector.load %arg5[%c16, %c0_18] : memref<48x128xf32, #tpu.memory_space<vmem>>, vector<32x128xf32>
    %cst_19 = arith.constant dense<0.000000e+00> : vector<8x128xf32>
    %37 = tpu.matmul %25, %36, %cst_19 {dimension_numbers = #tpu.dot_dimension_numbers<[1], [0], [0], [1], [0, 0, 1, 1], [], []>} : vector<8x32xf32>, vector<32x128xf32>, vector<8x128xf32> -> vector<8x128xf32>
    %38 = arith.addf %35, %37 : vector<8x128xf32>
    %c9 = arith.constant 9 : index
    %c0_20 = arith.constant 0 : index
    %39 = vector.load %arg3[%c9, %c0_20] : memref<22x128xf32, #tpu.memory_space<vmem>>, vector<1x128xf32>
    %40 = vector.broadcast %39 : vector<1x128xf32> to vector<8x128xf32>
    %41 = arith.addf %38, %40 : vector<8x128xf32>
    %c14 = arith.constant 14 : index
    %c0_21 = arith.constant 0 : index
    %42 = vector.load %arg3[%c14, %c0_21] : memref<22x128xf32, #tpu.memory_space<vmem>>, vector<1x128xf32>
    %c18 = arith.constant 18 : index
    %c0_22 = arith.constant 0 : index
    %43 = vector.load %arg3[%c18, %c0_22] : memref<22x128xf32, #tpu.memory_space<vmem>>, vector<1x128xf32>
    %cst_23 = arith.constant dense<0.000000e+00> : vector<128xf32>
    %44 = vector.multi_reduction <add>, %41, %cst_23 [0] : vector<8x128xf32> to vector<128xf32>
    %45 = vector.shape_cast %44 : vector<128xf32> to vector<1x128xf32>
    %cst_24 = arith.constant 8.000000e+00 : f32
    %46 = vector.broadcast %cst_24 : f32 to vector<1x128xf32>
    %47 = arith.divf %45, %46 : vector<1x128xf32>
    %48 = arith.mulf %41, %41 : vector<8x128xf32>
    %cst_25 = arith.constant dense<0.000000e+00> : vector<128xf32>
    %49 = vector.multi_reduction <add>, %48, %cst_25 [0] : vector<8x128xf32> to vector<128xf32>
    %50 = vector.shape_cast %49 : vector<128xf32> to vector<1x128xf32>
    %cst_26 = arith.constant 8.000000e+00 : f32
    %51 = vector.broadcast %cst_26 : f32 to vector<1x128xf32>
    %52 = arith.divf %50, %51 : vector<1x128xf32>
    %53 = arith.mulf %47, %47 : vector<1x128xf32>
    %54 = arith.subf %52, %53 : vector<1x128xf32>
    %cst_27 = arith.constant 0.000000e+00 : f32
    %55 = vector.broadcast %cst_27 : f32 to vector<1x128xf32>
    %56 = arith.maximumf %54, %55 : vector<1x128xf32>
    %57 = vector.broadcast %47 : vector<1x128xf32> to vector<8x128xf32>
    %58 = arith.subf %41, %57 : vector<8x128xf32>
    %cst_28 = arith.constant 9.99999974E-6 : f32
    %59 = vector.broadcast %cst_28 : f32 to vector<1x128xf32>
    %60 = arith.addf %56, %59 : vector<1x128xf32>
    %61 = math.rsqrt %60 : vector<1x128xf32>
    %62 = vector.broadcast %61 : vector<1x128xf32> to vector<8x128xf32>
    %63 = arith.mulf %58, %62 : vector<8x128xf32>
    %64 = vector.broadcast %42 : vector<1x128xf32> to vector<8x128xf32>
    %65 = arith.mulf %63, %64 : vector<8x128xf32>
    %66 = vector.broadcast %43 : vector<1x128xf32> to vector<8x128xf32>
    %67 = arith.addf %65, %66 : vector<8x128xf32>
    %cst_29 = arith.constant 0.000000e+00 : f32
    %68 = vector.broadcast %cst_29 : f32 to vector<8x128xf32>
    %69 = arith.maximumf %67, %68 : vector<8x128xf32>
    %70 = vector.extract_strided_slice %27 {offsets = [0, 128], sizes = [8, 128], strides = [1, 1]} : vector<8x512xf32> to vector<8x128xf32>
    %c6 = arith.constant 6 : index
    %c0_30 = arith.constant 0 : index
    %71 = vector.load %arg3[%c6, %c0_30] : memref<22x128xf32, #tpu.memory_space<vmem>>, vector<1x128xf32>
    %72 = vector.broadcast %71 : vector<1x128xf32> to vector<8x128xf32>
    %73 = arith.addf %70, %72 : vector<8x128xf32>
    %74 = arith.addf %69, %73 : vector<8x128xf32>
    %c0_31 = arith.constant 0 : index
    %c0_32 = arith.constant 0 : index
    %c0_33 = arith.constant 0 : index
    %75 = vector.load %arg6[%c0_31, %c0_32, %c0_33] : memref<3x128x128xf32, #tpu.memory_space<vmem>>, vector<1x128x128xf32>
    %76 = vector.shape_cast %75 : vector<1x128x128xf32> to vector<128x128xf32>
    %cst_34 = arith.constant dense<0.000000e+00> : vector<8x128xf32>
    %77 = tpu.matmul %74, %76, %cst_34 {dimension_numbers = #tpu.dot_dimension_numbers<[1], [0], [0], [1], [0, 0, 1, 1], [], []>} : vector<8x128xf32>, vector<128x128xf32>, vector<8x128xf32> -> vector<8x128xf32>
    %c10 = arith.constant 10 : index
    %c0_35 = arith.constant 0 : index
    %78 = vector.load %arg3[%c10, %c0_35] : memref<22x128xf32, #tpu.memory_space<vmem>>, vector<1x128xf32>
    %79 = vector.broadcast %78 : vector<1x128xf32> to vector<8x128xf32>
    %80 = arith.addf %77, %79 : vector<8x128xf32>
    %c15 = arith.constant 15 : index
    %c0_36 = arith.constant 0 : index
    %81 = vector.load %arg3[%c15, %c0_36] : memref<22x128xf32, #tpu.memory_space<vmem>>, vector<1x128xf32>
    %c19 = arith.constant 19 : index
    %c0_37 = arith.constant 0 : index
    %82 = vector.load %arg3[%c19, %c0_37] : memref<22x128xf32, #tpu.memory_space<vmem>>, vector<1x128xf32>
    %cst_38 = arith.constant dense<0.000000e+00> : vector<128xf32>
    %83 = vector.multi_reduction <add>, %80, %cst_38 [0] : vector<8x128xf32> to vector<128xf32>
    %84 = vector.shape_cast %83 : vector<128xf32> to vector<1x128xf32>
    %cst_39 = arith.constant 8.000000e+00 : f32
    %85 = vector.broadcast %cst_39 : f32 to vector<1x128xf32>
    %86 = arith.divf %84, %85 : vector<1x128xf32>
    %87 = arith.mulf %80, %80 : vector<8x128xf32>
    %cst_40 = arith.constant dense<0.000000e+00> : vector<128xf32>
    %88 = vector.multi_reduction <add>, %87, %cst_40 [0] : vector<8x128xf32> to vector<128xf32>
    %89 = vector.shape_cast %88 : vector<128xf32> to vector<1x128xf32>
    %cst_41 = arith.constant 8.000000e+00 : f32
    %90 = vector.broadcast %cst_41 : f32 to vector<1x128xf32>
    %91 = arith.divf %89, %90 : vector<1x128xf32>
    %92 = arith.mulf %86, %86 : vector<1x128xf32>
    %93 = arith.subf %91, %92 : vector<1x128xf32>
    %cst_42 = arith.constant 0.000000e+00 : f32
    %94 = vector.broadcast %cst_42 : f32 to vector<1x128xf32>
    %95 = arith.maximumf %93, %94 : vector<1x128xf32>
    %96 = vector.broadcast %86 : vector<1x128xf32> to vector<8x128xf32>
    %97 = arith.subf %80, %96 : vector<8x128xf32>
    %cst_43 = arith.constant 9.99999974E-6 : f32
    %98 = vector.broadcast %cst_43 : f32 to vector<1x128xf32>
    %99 = arith.addf %95, %98 : vector<1x128xf32>
    %100 = math.rsqrt %99 : vector<1x128xf32>
    %101 = vector.broadcast %100 : vector<1x128xf32> to vector<8x128xf32>
    %102 = arith.mulf %97, %101 : vector<8x128xf32>
    %103 = vector.broadcast %81 : vector<1x128xf32> to vector<8x128xf32>
    %104 = arith.mulf %102, %103 : vector<8x128xf32>
    %105 = vector.broadcast %82 : vector<1x128xf32> to vector<8x128xf32>
    %106 = arith.addf %104, %105 : vector<8x128xf32>
    %cst_44 = arith.constant 0.000000e+00 : f32
    %107 = vector.broadcast %cst_44 : f32 to vector<8x128xf32>
    %108 = arith.maximumf %106, %107 : vector<8x128xf32>
    %109 = arith.addf %69, %108 : vector<8x128xf32>
    %110 = vector.extract_strided_slice %27 {offsets = [0, 256], sizes = [8, 128], strides = [1, 1]} : vector<8x512xf32> to vector<8x128xf32>
    %c7 = arith.constant 7 : index
    %c0_45 = arith.constant 0 : index
    %111 = vector.load %arg3[%c7, %c0_45] : memref<22x128xf32, #tpu.memory_space<vmem>>, vector<1x128xf32>
    %112 = vector.broadcast %111 : vector<1x128xf32> to vector<8x128xf32>
    %113 = arith.addf %110, %112 : vector<8x128xf32>
    %114 = arith.addf %109, %113 : vector<8x128xf32>
    %c1 = arith.constant 1 : index
    %c0_46 = arith.constant 0 : index
    %c0_47 = arith.constant 0 : index
    %115 = vector.load %arg6[%c1, %c0_46, %c0_47] : memref<3x128x128xf32, #tpu.memory_space<vmem>>, vector<1x128x128xf32>
    %116 = vector.shape_cast %115 : vector<1x128x128xf32> to vector<128x128xf32>
    %cst_48 = arith.constant dense<0.000000e+00> : vector<8x128xf32>
    %117 = tpu.matmul %114, %116, %cst_48 {dimension_numbers = #tpu.dot_dimension_numbers<[1], [0], [0], [1], [0, 0, 1, 1], [], []>} : vector<8x128xf32>, vector<128x128xf32>, vector<8x128xf32> -> vector<8x128xf32>
    %c11 = arith.constant 11 : index
    %c0_49 = arith.constant 0 : index
    %118 = vector.load %arg3[%c11, %c0_49] : memref<22x128xf32, #tpu.memory_space<vmem>>, vector<1x128xf32>
    %119 = vector.broadcast %118 : vector<1x128xf32> to vector<8x128xf32>
    %120 = arith.addf %117, %119 : vector<8x128xf32>
    %c16_50 = arith.constant 16 : index
    %c0_51 = arith.constant 0 : index
    %121 = vector.load %arg3[%c16_50, %c0_51] : memref<22x128xf32, #tpu.memory_space<vmem>>, vector<1x128xf32>
    %c20 = arith.constant 20 : index
    %c0_52 = arith.constant 0 : index
    %122 = vector.load %arg3[%c20, %c0_52] : memref<22x128xf32, #tpu.memory_space<vmem>>, vector<1x128xf32>
    %cst_53 = arith.constant dense<0.000000e+00> : vector<128xf32>
    %123 = vector.multi_reduction <add>, %120, %cst_53 [0] : vector<8x128xf32> to vector<128xf32>
    %124 = vector.shape_cast %123 : vector<128xf32> to vector<1x128xf32>
    %cst_54 = arith.constant 8.000000e+00 : f32
    %125 = vector.broadcast %cst_54 : f32 to vector<1x128xf32>
    %126 = arith.divf %124, %125 : vector<1x128xf32>
    %127 = arith.mulf %120, %120 : vector<8x128xf32>
    %cst_55 = arith.constant dense<0.000000e+00> : vector<128xf32>
    %128 = vector.multi_reduction <add>, %127, %cst_55 [0] : vector<8x128xf32> to vector<128xf32>
    %129 = vector.shape_cast %128 : vector<128xf32> to vector<1x128xf32>
    %cst_56 = arith.constant 8.000000e+00 : f32
    %130 = vector.broadcast %cst_56 : f32 to vector<1x128xf32>
    %131 = arith.divf %129, %130 : vector<1x128xf32>
    %132 = arith.mulf %126, %126 : vector<1x128xf32>
    %133 = arith.subf %131, %132 : vector<1x128xf32>
    %cst_57 = arith.constant 0.000000e+00 : f32
    %134 = vector.broadcast %cst_57 : f32 to vector<1x128xf32>
    %135 = arith.maximumf %133, %134 : vector<1x128xf32>
    %136 = vector.broadcast %126 : vector<1x128xf32> to vector<8x128xf32>
    %137 = arith.subf %120, %136 : vector<8x128xf32>
    %cst_58 = arith.constant 9.99999974E-6 : f32
    %138 = vector.broadcast %cst_58 : f32 to vector<1x128xf32>
    %139 = arith.addf %135, %138 : vector<1x128xf32>
    %140 = math.rsqrt %139 : vector<1x128xf32>
    %141 = vector.broadcast %140 : vector<1x128xf32> to vector<8x128xf32>
    %142 = arith.mulf %137, %141 : vector<8x128xf32>
    %143 = vector.broadcast %121 : vector<1x128xf32> to vector<8x128xf32>
    %144 = arith.mulf %142, %143 : vector<8x128xf32>
    %145 = vector.broadcast %122 : vector<1x128xf32> to vector<8x128xf32>
    %146 = arith.addf %144, %145 : vector<8x128xf32>
    %cst_59 = arith.constant 0.000000e+00 : f32
    %147 = vector.broadcast %cst_59 : f32 to vector<8x128xf32>
    %148 = arith.maximumf %146, %147 : vector<8x128xf32>
    %149 = arith.addf %109, %148 : vector<8x128xf32>
    %150 = vector.extract_strided_slice %27 {offsets = [0, 384], sizes = [8, 128], strides = [1, 1]} : vector<8x512xf32> to vector<8x128xf32>
    %c8 = arith.constant 8 : index
    %c0_60 = arith.constant 0 : index
    %151 = vector.load %arg3[%c8, %c0_60] : memref<22x128xf32, #tpu.memory_space<vmem>>, vector<1x128xf32>
    %152 = vector.broadcast %151 : vector<1x128xf32> to vector<8x128xf32>
    %153 = arith.addf %150, %152 : vector<8x128xf32>
    %154 = arith.addf %149, %153 : vector<8x128xf32>
    %c2 = arith.constant 2 : index
    %c0_61 = arith.constant 0 : index
    %c0_62 = arith.constant 0 : index
    %155 = vector.load %arg6[%c2, %c0_61, %c0_62] : memref<3x128x128xf32, #tpu.memory_space<vmem>>, vector<1x128x128xf32>
    %156 = vector.shape_cast %155 : vector<1x128x128xf32> to vector<128x128xf32>
    %cst_63 = arith.constant dense<0.000000e+00> : vector<8x128xf32>
    %157 = tpu.matmul %154, %156, %cst_63 {dimension_numbers = #tpu.dot_dimension_numbers<[1], [0], [0], [1], [0, 0, 1, 1], [], []>} : vector<8x128xf32>, vector<128x128xf32>, vector<8x128xf32> -> vector<8x128xf32>
    %c12 = arith.constant 12 : index
    %c0_64 = arith.constant 0 : index
    %158 = vector.load %arg3[%c12, %c0_64] : memref<22x128xf32, #tpu.memory_space<vmem>>, vector<1x128xf32>
    %159 = vector.broadcast %158 : vector<1x128xf32> to vector<8x128xf32>
    %160 = arith.addf %157, %159 : vector<8x128xf32>
    %c17 = arith.constant 17 : index
    %c0_65 = arith.constant 0 : index
    %161 = vector.load %arg3[%c17, %c0_65] : memref<22x128xf32, #tpu.memory_space<vmem>>, vector<1x128xf32>
    %c21 = arith.constant 21 : index
    %c0_66 = arith.constant 0 : index
    %162 = vector.load %arg3[%c21, %c0_66] : memref<22x128xf32, #tpu.memory_space<vmem>>, vector<1x128xf32>
    %cst_67 = arith.constant dense<0.000000e+00> : vector<128xf32>
    %163 = vector.multi_reduction <add>, %160, %cst_67 [0] : vector<8x128xf32> to vector<128xf32>
    %164 = vector.shape_cast %163 : vector<128xf32> to vector<1x128xf32>
    %cst_68 = arith.constant 8.000000e+00 : f32
    %165 = vector.broadcast %cst_68 : f32 to vector<1x128xf32>
    %166 = arith.divf %164, %165 : vector<1x128xf32>
    %167 = arith.mulf %160, %160 : vector<8x128xf32>
    %cst_69 = arith.constant dense<0.000000e+00> : vector<128xf32>
    %168 = vector.multi_reduction <add>, %167, %cst_69 [0] : vector<8x128xf32> to vector<128xf32>
    %169 = vector.shape_cast %168 : vector<128xf32> to vector<1x128xf32>
    %cst_70 = arith.constant 8.000000e+00 : f32
    %170 = vector.broadcast %cst_70 : f32 to vector<1x128xf32>
    %171 = arith.divf %169, %170 : vector<1x128xf32>
    %172 = arith.mulf %166, %166 : vector<1x128xf32>
    %173 = arith.subf %171, %172 : vector<1x128xf32>
    %cst_71 = arith.constant 0.000000e+00 : f32
    %174 = vector.broadcast %cst_71 : f32 to vector<1x128xf32>
    %175 = arith.maximumf %173, %174 : vector<1x128xf32>
    %176 = vector.broadcast %166 : vector<1x128xf32> to vector<8x128xf32>
    %177 = arith.subf %160, %176 : vector<8x128xf32>
    %cst_72 = arith.constant 9.99999974E-6 : f32
    %178 = vector.broadcast %cst_72 : f32 to vector<1x128xf32>
    %179 = arith.addf %175, %178 : vector<1x128xf32>
    %180 = math.rsqrt %179 : vector<1x128xf32>
    %181 = vector.broadcast %180 : vector<1x128xf32> to vector<8x128xf32>
    %182 = arith.mulf %177, %181 : vector<8x128xf32>
    %183 = vector.broadcast %161 : vector<1x128xf32> to vector<8x128xf32>
    %184 = arith.mulf %182, %183 : vector<8x128xf32>
    %185 = vector.broadcast %162 : vector<1x128xf32> to vector<8x128xf32>
    %186 = arith.addf %184, %185 : vector<8x128xf32>
    %cst_73 = arith.constant 0.000000e+00 : f32
    %187 = vector.broadcast %cst_73 : f32 to vector<8x128xf32>
    %188 = arith.maximumf %186, %187 : vector<8x128xf32>
    %189 = arith.addf %149, %188 : vector<8x128xf32>
    %c0_74 = arith.constant 0 : index
    %c0_75 = arith.constant 0 : index
    %190 = vector.load %arg7[%c0_74, %c0_75] : memref<128x16xf32, #tpu.memory_space<vmem>>, vector<128x16xf32>
    %cst_76 = arith.constant dense<0.000000e+00> : vector<8x16xf32>
    %191 = tpu.matmul %189, %190, %cst_76 {dimension_numbers = #tpu.dot_dimension_numbers<[1], [0], [0], [1], [0, 0, 1, 1], [], []>} : vector<8x128xf32>, vector<128x16xf32>, vector<8x16xf32> -> vector<8x16xf32>
    %c13 = arith.constant 13 : index
    %c0_77 = arith.constant 0 : index
    %192 = vector.load %arg3[%c13, %c0_77] : memref<22x128xf32, #tpu.memory_space<vmem>>, vector<1x16xf32>
    %193 = vector.broadcast %192 : vector<1x16xf32> to vector<8x16xf32>
    %194 = arith.addf %191, %193 : vector<8x16xf32>
    %c0_78 = arith.constant 0 : index
    %c0_79 = arith.constant 0 : index
    %195 = vector.load %arg8[%c0_78, %c0_79] : memref<8x16xf32, #tpu.memory_space<vmem>>, vector<8x16xf32>
    tpu.vector_store %arg8[%c0_78, %c0_79], %194 {strides = array<i32>} : memref<8x16xf32, #tpu.memory_space<vmem>>, vector<8x16xf32>,
    return
  }
}

</mosaic_0001>

<llo_original>
// kernel: tpu_custom_call.1
$region0: #{tpu_custom_call.1}
  #allocation0 [shape = 'u32[]', space=smem, size = 0x4, offset = 0x4, fixed_abs, tag = 'smem constant byte address 0x4 - core index']
  #allocation1 [shape = 'u32[72,128]{1,0:T(1,128)}', space=vmem, size = 0x9000, scoped, tag = 'internal scratch']
  %s0 = inlined_call_operand.hbm [shape: f32[8,16], index: 0, kind: input, shape index: {}]
  %s1 = inlined_call_operand.vmem [shape: f32[8,1], index: 1, kind: input, shape index: {}]
  %s2 = inlined_call_operand.vmem [shape: s32[8,1], index: 2, kind: input, shape index: {}]
  %s3 = inlined_call_operand.vmem [shape: f32[22,128], index: 3, kind: input, shape index: {}]
  %s4 = inlined_call_operand.vmem [shape: f32[32,512], index: 4, kind: input, shape index: {}]
  %s5 = inlined_call_operand.hbm [shape: f32[48,128], index: 5, kind: input, shape index: {}]
  %s6 = inlined_call_operand.hbm [shape: f32[3,128,128], index: 6, kind: input, shape index: {}]
  %s7 = inlined_call_operand.vmem [shape: f32[128,16], index: 7, kind: input, shape index: {}]
  %s8 = inlined_call_operand.hbm [shape: f32[8,16], index: 8, kind: output, shape index: {}]
  %s9 = sld [smem:[#allocation0]]
  $region54: #{tpu_custom_call.1} parent=0
    _
  %s11 = ssub.s32 1, %s9
  %s12 = scalar_select 0, %s11, %s9
  $region1: #{tpu_custom_call.1} parent=0
    #allocation2 [shape = 'u8[4096]{0}', space=vmem, size = 0x1000, scoped, tag = 'input window, operand 0, single buffered']
    #allocation3 [shape = 's32[1]{0}', space=sflag, size = 0x4, scoped, tag = 'scoped memory for tpu_custom_call.1']
    #allocation4 [shape = 's32[1]{0}', space=sflag, size = 0x4, scoped, tag = 'scoped memory for tpu_custom_call.1']
    #allocation5 [shape = 'u8[24576]{0}', space=vmem, size = 0x6000, scoped, tag = 'input window, operand 5, single buffered']
    #allocation6 [shape = 's32[1]{0}', space=sflag, size = 0x4, scoped, tag = 'scoped memory for tpu_custom_call.1']
    #allocation7 [shape = 'u8[196608]{0}', space=vmem, size = 0x30000, scoped, tag = 'input window, operand 6, single buffered']
    #allocation8 [shape = 'u8[4096]{0}', space=vmem, size = 0x1000, scoped, tag = 'output window, operand 0, single buffered']
    %13 = vsyncpa [#allocation3], 0
    %14 = vsyncpa [#allocation6], 0
    %15 = vsyncpa [#allocation4], 0
    // Predicated region
    $region2: #{tpu_custom_call.1} parent=1 // pred_check
      _
    $region3: #{tpu_custom_call.1} parent=1 // pred_check_branch
      %17 = sbr.rel (0) target = $region5
    $region4: #{tpu_custom_call.1} parent=1 // pred_region
      %19 = vsyncadd [#allocation3], 0
      %s21 = sshll.u32 %s0, 4
      %s22 = int_to_ptr.hbm [resolvable:$true] %s21
      %s23 = sshll.u32 [#allocation2], 4
      %s24 = int_to_ptr.vmem [resolvable:$true] %s23
      %26 = dma.hbm_to_vmem [thread:$0]  %s22, 128, %s24, [#allocation3]
    $region5: #{tpu_custom_call.1} parent=1 // pred_fallthru
      _
    // Predicated region
    $region6: #{tpu_custom_call.1} parent=1 // pred_check
      _
    $region7: #{tpu_custom_call.1} parent=1 // pred_check_branch
      %28 = sbr.rel (0) target = $region9
    $region8: #{tpu_custom_call.1} parent=1 // pred_region
      _
    $region9: #{tpu_custom_call.1} parent=1 // pred_fallthru
      _
    // Predicated region
    $region10: #{tpu_custom_call.1} parent=1 // pred_check
      _
    $region11: #{tpu_custom_call.1} parent=1 // pred_check_branch
      %30 = sbr.rel (0) target = $region13
    $region12: #{tpu_custom_call.1} parent=1 // pred_region
      _
    $region13: #{tpu_custom_call.1} parent=1 // pred_fallthru
      _
    // Predicated region
    $region14: #{tpu_custom_call.1} parent=1 // pred_check
      _
    $region15: #{tpu_custom_call.1} parent=1 // pred_check_branch
      %32 = sbr.rel (0) target = $region17
    $region16: #{tpu_custom_call.1} parent=1 // pred_region
      _
    $region17: #{tpu_custom_call.1} parent=1 // pred_fallthru
      _
    // Predicated region
    $region18: #{tpu_custom_call.1} parent=1 // pred_check
      _
    $region19: #{tpu_custom_call.1} parent=1 // pred_check_branch
      %34 = sbr.rel (0) target = $region21
    $region20: #{tpu_custom_call.1} parent=1 // pred_region
      _
    $region21: #{tpu_custom_call.1} parent=1 // pred_fallthru
      _
    // Predicated region
    $region22: #{tpu_custom_call.1} parent=1 // pred_check
      _
    $region23: #{tpu_custom_call.1} parent=1 // pred_check_branch
      %36 = sbr.rel (0) target = $region25
    $region24: #{tpu_custom_call.1} parent=1 // pred_region
      %38 = vsyncadd [#allocation6], 0
      %s39 = sshll.u32 %s5, 4
      %s40 = int_to_ptr.hbm [resolvable:$true] %s39
      %s41 = sshll.u32 [#allocation5], 4
      %s42 = int_to_ptr.vmem [resolvable:$true] %s41
      %47 = dma.hbm_to_vmem [thread:$0]  %s40, 768, %s42, [#allocation6], 128, 128, 8
    $region25: #{tpu_custom_call.1} parent=1 // pred_fallthru
      _
    // Predicated region
    $region26: #{tpu_custom_call.1} parent=1 // pred_check
      _
    $region27: #{tpu_custom_call.1} parent=1 // pred_check_branch
      %49 = sbr.rel (0) target = $region29
    $region28: #{tpu_custom_call.1} parent=1 // pred_region
      %51 = vsyncadd [#allocation6], 0
      %s52 = sshll.u32 %s6, 4
      %s53 = int_to_ptr.hbm [resolvable:$true] %s52
      %s54 = sshll.u32 [#allocation7], 4
      %s55 = int_to_ptr.vmem [resolvable:$true] %s54
      %60 = dma.hbm_to_vmem [thread:$0]  %s53, 6144, %s55, [#allocation6], 128, 128, 8
    $region29: #{tpu_custom_call.1} parent=1 // pred_fallthru
      _
    // Predicated region
    $region30: #{tpu_custom_call.1} parent=1 // pred_check
      _
    $region31: #{tpu_custom_call.1} parent=1 // pred_check_branch
      %62 = sbr.rel (0) target = $region33
    $region32: #{tpu_custom_call.1} parent=1 // pred_region
      _
    $region33: #{tpu_custom_call.1} parent=1 // pred_fallthru
      _
    // Predicated region
    $region34: #{tpu_custom_call.1} parent=1 // pred_check
      _
    $region35: #{tpu_custom_call.1} parent=1 // pred_check_branch
      %64 = sbr.rel (0) target = $region37
    $region36: #{tpu_custom_call.1} parent=1 // pred_region
      %66 = dma.done [#allocation3], 128
    $region37: #{tpu_custom_call.1} parent=1 // pred_fallthru
      _
    // Predicated region
    $region38: #{tpu_custom_call.1} parent=1 // pred_check
      _
    $region39: #{tpu_custom_call.1} parent=1 // pred_check_branch
      %68 = sbr.rel (0) target = $region41
    $region40: #{tpu_custom_call.1} parent=1 // pred_region
      %70 = dma.done [#allocation6], 768
    $region41: #{tpu_custom_call.1} parent=1 // pred_fallthru
      _
    // Predicated region
    $region42: #{tpu_custom_call.1} parent=1 // pred_check
      _
    $region43: #{tpu_custom_call.1} parent=1 // pred_check_branch
      %72 = sbr.rel (0) target = $region45
    $region44: #{tpu_custom_call.1} parent=1 // pred_region
      %74 = dma.done [#allocation6], 6144
    $region45: #{tpu_custom_call.1} parent=1 // pred_fallthru
      _
    %v75 = vld [vmem:[%s1] sm:$0xff]
    %v76 = vld [vmem:[%s3 + $0x4] sm:$0x1]
    %78 = vset.pattern.permute.xlu0 0
    %79 = vperm.xlu0 %78, %v75
    %v80 = vpop.permute.xlu0 %79
    %v82 = vperm.slane %v76, 0
    %v83 = vmul.f32 %v80, %v82
    %v84 = vmul.f32 %v83, 1.5707964
    %v85 = vand.u32 2147483647, %v84
    %vm86 = vcmp.le.f32.partialorder %v85, 0.7853982
    %vm87 = vcmp.lt.s32.totalorder %v84, 0
    %v88 = vand.u32 %v84, 2139095040
    %v89 = vshrl.u32 %v88, 23
    %v90 = vsub.s32 %v89, 127
    %v91 = vand.u32 2147483647, %v84
    %v92 = vand.u32 %v91, 8388607
    %v93 = vor.u32 %v92, 8388608
    %v94 = vsub.s32 0, %v93
    %v95 = vadd.s32 %v90, 1
    %vm96 = vcmp.gt.s32.totalorder %v95, 0
    %v97 = vsel %vm96, %v95, 0
    %v98 = vshrl.u32 %v97, 5
    %v99 = vand.u32 %v97, 31
    %v100 = vsub.s32 32, %v99
    %v101 = vshrl.u32 683565275, %v100
    %v102 = vshll.u32 683565275, %v99
    %v103 = vshrl.u32 2475754826, %v100
    %v104 = vor.u32 %v102, %v103
    %v105 = vshll.u32 2475754826, %v99
    %v106 = vshrl.u32 2131351028, %v100
    %v107 = vor.u32 %v105, %v106
    %v108 = vshll.u32 2131351028, %v99
    %v109 = vshrl.u32 2102212464, %v100
    %v110 = vor.u32 %v108, %v109
    %v111 = vshll.u32 2102212464, %v99
    %v112 = vshrl.u32 920167782, %v100
    %v113 = vor.u32 %v111, %v112
    %v114 = vshll.u32 920167782, %v99
    %v115 = vshrl.u32 1326507024, %v100
    %v116 = vor.u32 %v114, %v115
    %vm117 = vcmp.lt.s32.totalorder %v98, 1
    %vm118 = vcmp.lt.s32.totalorder %v98, 2
    %vm119 = vcmp.lt.s32.totalorder %v98, 3
    %vm120 = vcmp.lt.s32.totalorder %v98, 4
    %v121 = vsel %vm117, %v101, %v104
    %v122 = vsel %vm120, %v110, 2102212464
    %v123 = vsel %vm119, %v107, %v122
    %v124 = vsel %vm118, %v121, %v123
    %v125 = vsel %vm117, %v104, %v107
    %v126 = vsel %vm120, %v113, 920167782
    %v127 = vsel %vm119, %v110, %v126
    %v128 = vsel %vm118, %v125, %v127
    %v129 = vsel %vm117, %v107, %v110
    %v130 = vsel %vm120, %v116, 1326507024
    %v131 = vsel %vm119, %v113, %v130
    %v132 = vsel %vm118, %v129, %v131
    %v133 = vshll.u32 %v93, 8
    %v134 = vand.u32 %v133, 65535
    %v135 = vshrl.u32 %v133, 16
    %v136 = vand.u32 %v132, 65535
    %v137 = vshrl.u32 %v132, 16
    %v138 = vmul.u32 %v134, %v136
    %v139 = vmul.u32 %v134, %v137
    %v140 = vmul.u32 %v135, %v136
    %v141 = vmul.u32 %v135, %v137
    %v142 = vshll.u32 %v139, 16
    %v143 = vshrl.u32 %v139, 16
    %v144 = vshll.u32 %v140, 16
    %v145 = vshrl.u32 %v140, 16
    %vm146 = vc.u32 %v138, %v142
    %v147 = vsel %vm146, 1, 0
    %v148 = vadd.s32 %v138, %v142
    %v149 = vadd.s32 %v141, %v147
    %vm150 = vc.u32 %v148, %v144
    %v151 = vsel %vm150, 1, 0
    %v152 = vadd.s32 %v148, %v144
    %v153 = vadd.s32 %v149, %v151
    %v154 = vadd.s32 %v153, %v143
    %v155 = vadd.s32 %v154, %v145
    %v156 = vand.u32 %v133, 65535
    %v157 = vshrl.u32 %v133, 16
    %v158 = vand.u32 %v128, 65535
    %v159 = vshrl.u32 %v128, 16
    %v160 = vmul.u32 %v156, %v158
    %v161 = vmul.u32 %v156, %v159
    %v162 = vmul.u32 %v157, %v158
    %v163 = vmul.u32 %v157, %v159
    %v164 = vshll.u32 %v161, 16
    %v165 = vshrl.u32 %v161, 16
    %v166 = vshll.u32 %v162, 16
    %v167 = vshrl.u32 %v162, 16
    %vm168 = vc.u32 %v160, %v164
    %v169 = vsel %vm168, 1, 0
    %v170 = vadd.s32 %v160, %v164
    %v171 = vadd.s32 %v163, %v169
    %vm172 = vc.u32 %v170, %v166
    %v173 = vsel %vm172, 1, 0
    %v174 = vadd.s32 %v170, %v166
    %v175 = vadd.s32 %v171, %v173
    %v176 = vadd.s32 %v175, %v165
    %v177 = vadd.s32 %v176, %v167
    %v178 = vmul.u32 %v133, %v124
    %v179 = vadd.s32 %v155, %v174
    %vm180 = vc.u32 %v155, %v174
    %v181 = vadd.s32 %v177, 1
    %v182 = vsel %vm180, %v181, %v177
    %v183 = vadd.s32 %v178, %v182
    %v184 = vadd.s32 %v183, 536870912
    %v185 = vshrl.u32 %v184, 30
    %v186 = vshll.u32 %v185, 30
    %v187 = vsub.s32 %v183, %v186
    %vm188 = vcmp.lt.s32.totalorder %v187, 0
    %v189 = vsub.s32 0, %v187
    %v190 = vsel %vm188, %v189, %v187
    %v191 = vclz %v190
    %v192 = vsub.s32 %v191, 2
    %vm193 = vcmp.gt.s32.totalorder 0, %v192
    %v194 = vsel %vm193, 0, %v192
    %v195 = vsub.s32 32, %v194
    %v196 = vshll.u32 %v187, %v194
    %v197 = vshrl.u32 %v179, %v195
    %v198 = vor.u32 %v196, %v197
    %v199 = vsub.s32 4294967266, %v194
    %v200 = vadd.s32 %v199, 127
    %v201 = vshll.u32 %v200, 23
    %v202 = vor.u32 4788187, %v201
    %v203 = vand.u32 2147483647, %v202
    %v205 = vcvt.s32.f32 %v198
    %v206 = vmul.f32 %v205, %v203
    %v207 = vxor.u32 %v206, 2147483648
    %v208 = vsel %vm87, %v207, %v206
    %v209 = vsub.s32 4, %v185
    %v210 = vsel %vm87, %v209, %v185
    %v211 = vsel %vm86, %v84, %v208
    %v212 = vsel %vm86, 0, %v210
    %v213 = vmul.f32 %v211, %v211
    %v214 = vmul.f32 %v213, -0.001358992
    %v215 = vadd.f32 %v214, 0.041655596
    %v216 = vmul.f32 %v213, %v215
    %v217 = vadd.f32 %v216, -0.4999988
    %v218 = vmul.f32 %v213, %v217
    %v219 = vadd.f32 1.0, %v218
    %v220 = vmul.f32 %v211, %v211
    %v221 = vmul.f32 %v220, -0.00019511016
    %v222 = vadd.f32 %v221, 0.008332121
    %v223 = vmul.f32 %v220, %v222
    %v224 = vadd.f32 %v223, -0.16666654
    %v225 = vmul.f32 %v220, %v224
    %v226 = vadd.f32 %v225, 1.0
    %v227 = vmul.f32 %v226, %v211
    %vm228 = vweird.f32 %v84
    %v229 = vadd.s32 %v212, 3
    %v230 = vand.u32 %v229, 3
    %vm231 = vcmp.lt.s32.totalorder %v230, 2
    %vm232 = vcmp.eq.s32.totalorder %v230, 0
    %v233 = vxor.u32 %v227, 2147483648
    %v234 = vsel %vm232, %v219, %v233
    %vm235 = vcmp.eq.s32.totalorder %v230, 2
    %v236 = vxor.u32 %v219, 2147483648
    %v237 = vsel %vm235, %v236, %v227
    %v238 = vsel %vm231, %v234, %v237
    %v239 = vsel %vm228, nan, %v238
    %v240 = vand.u32 2147483647, %v84
    %vm241 = vcmp.le.f32.partialorder %v240, 0.7853982
    %vm242 = vcmp.lt.s32.totalorder %v84, 0
    %v243 = vand.u32 %v84, 2139095040
    %v244 = vshrl.u32 %v243, 23
    %v245 = vsub.s32 %v244, 127
    %v246 = vand.u32 2147483647, %v84
    %v247 = vand.u32 %v246, 8388607
    %v248 = vor.u32 %v247, 8388608
    %v249 = vsub.s32 0, %v248
    %v250 = vadd.s32 %v245, 1
    %vm251 = vcmp.gt.s32.totalorder %v250, 0
    %v252 = vsel %vm251, %v250, 0
    %v253 = vshrl.u32 %v252, 5
    %v254 = vand.u32 %v252, 31
    %v255 = vsub.s32 32, %v254
    %v256 = vshrl.u32 683565275, %v255
    %v257 = vshll.u32 683565275, %v254
    %v258 = vshrl.u32 2475754826, %v255
    %v259 = vor.u32 %v257, %v258
    %v260 = vshll.u32 2475754826, %v254
    %v261 = vshrl.u32 2131351028, %v255
    %v262 = vor.u32 %v260, %v261
    %v263 = vshll.u32 2131351028, %v254
    %v264 = vshrl.u32 2102212464, %v255
    %v265 = vor.u32 %v263, %v264
    %v266 = vshll.u32 2102212464, %v254
    %v267 = vshrl.u32 920167782, %v255
    %v268 = vor.u32 %v266, %v267
    %v269 = vshll.u32 920167782, %v254
    %v270 = vshrl.u32 1326507024, %v255
    %v271 = vor.u32 %v269, %v270
    %vm272 = vcmp.lt.s32.totalorder %v253, 1
    %vm273 = vcmp.lt.s32.totalorder %v253, 2
    %vm274 = vcmp.lt.s32.totalorder %v253, 3
    %vm275 = vcmp.lt.s32.totalorder %v253, 4
    %v276 = vsel %vm272, %v256, %v259
    %v277 = vsel %vm275, %v265, 2102212464
    %v278 = vsel %vm274, %v262, %v277
    %v279 = vsel %vm273, %v276, %v278
    %v280 = vsel %vm272, %v259, %v262
    %v281 = vsel %vm275, %v268, 920167782
    %v282 = vsel %vm274, %v265, %v281
    %v283 = vsel %vm273, %v280, %v282
    %v284 = vsel %vm272, %v262, %v265
    %v285 = vsel %vm275, %v271, 1326507024
    %v286 = vsel %vm274, %v268, %v285
    %v287 = vsel %vm273, %v284, %v286
    %v288 = vshll.u32 %v248, 8
    %v289 = vand.u32 %v288, 65535
    %v290 = vshrl.u32 %v288, 16
    %v291 = vand.u32 %v287, 65535
    %v292 = vshrl.u32 %v287, 16
    %v293 = vmul.u32 %v289, %v291
    %v294 = vmul.u32 %v289, %v292
    %v295 = vmul.u32 %v290, %v291
    %v296 = vmul.u32 %v290, %v292
    %v297 = vshll.u32 %v294, 16
    %v298 = vshrl.u32 %v294, 16
    %v299 = vshll.u32 %v295, 16
    %v300 = vshrl.u32 %v295, 16
    %vm301 = vc.u32 %v293, %v297
    %v302 = vsel %vm301, 1, 0
    %v303 = vadd.s32 %v293, %v297
    %v304 = vadd.s32 %v296, %v302
    %vm305 = vc.u32 %v303, %v299
    %v306 = vsel %vm305, 1, 0
    %v307 = vadd.s32 %v303, %v299
    %v308 = vadd.s32 %v304, %v306
    %v309 = vadd.s32 %v308, %v298
    %v310 = vadd.s32 %v309, %v300
    %v311 = vand.u32 %v288, 65535
    %v312 = vshrl.u32 %v288, 16
    %v313 = vand.u32 %v283, 65535
    %v314 = vshrl.u32 %v283, 16
    %v315 = vmul.u32 %v311, %v313
    %v316 = vmul.u32 %v311, %v314
    %v317 = vmul.u32 %v312, %v313
    %v318 = vmul.u32 %v312, %v314
    %v319 = vshll.u32 %v316, 16
    %v320 = vshrl.u32 %v316, 16
    %v321 = vshll.u32 %v317, 16
    %v322 = vshrl.u32 %v317, 16
    %vm323 = vc.u32 %v315, %v319
    %v324 = vsel %vm323, 1, 0
    %v325 = vadd.s32 %v315, %v319
    %v326 = vadd.s32 %v318, %v324
    %vm327 = vc.u32 %v325, %v321
    %v328 = vsel %vm327, 1, 0
    %v329 = vadd.s32 %v325, %v321
    %v330 = vadd.s32 %v326, %v328
    %v331 = vadd.s32 %v330, %v320
    %v332 = vadd.s32 %v331, %v322
    %v333 = vmul.u32 %v288, %v279
    %v334 = vadd.s32 %v310, %v329
    %vm335 = vc.u32 %v310, %v329
    %v336 = vadd.s32 %v332, 1
    %v337 = vsel %vm335, %v336, %v332
    %v338 = vadd.s32 %v333, %v337
    %v339 = vadd.s32 %v338, 536870912
    %v340 = vshrl.u32 %v339, 30
    %v341 = vshll.u32 %v340, 30
    %v342 = vsub.s32 %v338, %v341
    %vm343 = vcmp.lt.s32.totalorder %v342, 0
    %v344 = vsub.s32 0, %v342
    %v345 = vsel %vm343, %v344, %v342
    %v346 = vclz %v345
    %v347 = vsub.s32 %v346, 2
    %vm348 = vcmp.gt.s32.totalorder 0, %v347
    %v349 = vsel %vm348, 0, %v347
    %v350 = vsub.s32 32, %v349
    %v351 = vshll.u32 %v342, %v349
    %v352 = vshrl.u32 %v334, %v350
    %v353 = vor.u32 %v351, %v352
    %v354 = vsub.s32 4294967266, %v349
    %v355 = vadd.s32 %v354, 127
    %v356 = vshll.u32 %v355, 23
    %v357 = vor.u32 4788187, %v356
    %v358 = vand.u32 2147483647, %v357
    %v360 = vcvt.s32.f32 %v353
    %v361 = vmul.f32 %v360, %v358
    %v362 = vxor.u32 %v361, 2147483648
    %v363 = vsel %vm242, %v362, %v361
    %v364 = vsub.s32 4, %v340
    %v365 = vsel %vm242, %v364, %v340
    %v366 = vsel %vm241, %v84, %v363
    %v367 = vsel %vm241, 0, %v365
    %v368 = vmul.f32 %v366, %v366
    %v369 = vmul.f32 %v368, -0.001358992
    %v370 = vadd.f32 %v369, 0.041655596
    %v371 = vmul.f32 %v368, %v370
    %v372 = vadd.f32 %v371, -0.4999988
    %v373 = vmul.f32 %v368, %v372
    %v374 = vadd.f32 1.0, %v373
    %v375 = vmul.f32 %v366, %v366
    %v376 = vmul.f32 %v375, -0.00019511016
    %v377 = vadd.f32 %v376, 0.008332121
    %v378 = vmul.f32 %v375, %v377
    %v379 = vadd.f32 %v378, -0.16666654
    %v380 = vmul.f32 %v375, %v379
    %v381 = vadd.f32 %v380, 1.0
    %v382 = vmul.f32 %v381, %v366
    %vm383 = vweird.f32 %v84
    %v384 = vand.u32 %v367, 3
    %vm385 = vcmp.lt.s32.totalorder %v384, 2
    %vm386 = vcmp.eq.s32.totalorder %v384, 0
    %v387 = vxor.u32 %v382, 2147483648
    %v388 = vsel %vm386, %v374, %v387
    %vm389 = vcmp.eq.s32.totalorder %v384, 2
    %v390 = vxor.u32 %v374, 2147483648
    %v391 = vsel %vm389, %v390, %v382
    %v392 = vsel %vm385, %v388, %v391
    %v393 = vsel %vm383, nan, %v392
    %395 = vrot.lane.b32.xlu0 %v393, 16
    %v396 = vpop.permute.xlu0 %395
    %vm398 = vcmask 130048
    %v399 = vsel %vm398, %v239, %v396
    %v400 = vxor.u32 %v399, 2147483648
    %v401 = vmul.f32 %v400, 1.442695
    %v402 = vpow.pop %v401
    %v403 = vadd.f32 %v402, 1.0
    %v404 = vrcp.pop %v403
    %v405 = vmul.f32 %v403, %v404
    %v406 = vsub.f32 1.0, %v405
    %v407 = vmul.f32 %v404, %v406
    %v408 = vadd.f32 %v404, %v407
    %vm409 = vweird.f32 %v403
    %vm410 = vweird.f32 %v404
    %vm411 = vmor %vm409, %vm410
    %v412 = vsel %vm411, %v404, %v408
    %v413 = vand.u32 2147483647, %v403
    %vm414 = vcmp.eq.f32.partialorder %v413, 8.507059e+37
    %v415 = vand.u32 %v403, 2147483648
    %v416 = vor.u32 1.1754944e-38, %v415
    %v417 = vsel %vm414, %v416, %v412
    %v418 = vmul.f32 1.0, %v417
    %v419 = vmul.f32 %v399, %v418
    %v420 = vlaneseq
    %v421 = vand.u32 %v420, 127
    %v422 = vld [vmem:[%s2] sm:$0xff]
    %423 = vset.pattern.permute.xlu0 0
    %424 = vperm.xlu0 %423, %v422
    %v425 = vpop.permute.xlu0 %424
    %vm426 = vcmp.eq.s32.totalorder %v421, %v425
    %v427 = vsel %vm426, 1, 0
    %v428 = vcvt.s32.f32 %v427
    %v429 = vld [vmem:[%s3] sm:$0xf]
    %vm430 = vcmask 31744
    %v432 = vsel %vm430, %v428, 0
    %vm434 = vcmask 1043456
    %v436 = vsel %vm434, %v429, 0
    %438 = vmatpush.msra.mxu0 0.0
    %439 = vmatpush.msra.mxu0 0.0
    %440 = vmatpush.msra.mxu0 0.0
    %441 = vmatpush.msra.mxu0 0.0
    %442 = vmatpush.msra.mxu0 0.0
    %443 = vmatpush.msra.mxu0 0.0
    %444 = vmatpush.msra.mxu0 0.0
    %445 = vmatpush.msra.mxu0 0.0
    %446 = vmatpush.msra.mxu0 0.0
    %447 = vmatpush.msra.mxu0 0.0
    %448 = vmatpush.msra.mxu0 0.0
    %449 = vmatpush.msra.mxu0 0.0
    %450 = vmatpush.msra.mxu0 0.0
    %451 = vmatpush.msra.mxu0 0.0
    %452 = vmatpush.msra.mxu0 0.0
    %453 = vmatpush.msra.mxu0 %v436
    %454 = vmatmul.f32.gmra.mxu0 %v432
    %v455 = vpop.f32.mrf.mxu0
    %v456 = vadd.f32 0.0, %v455
    %457 = vdwg.mxu0
    %v458 = vld [vmem:[%s4] sm:$0xff]
    %v459 = vld [vmem:[%s4 + $0x8] sm:$0xff]
    %v460 = vld [vmem:[%s4 + $0x10] sm:$0xff]
    %v461 = vld [vmem:[%s4 + $0x18] sm:$0xff]
    %v462 = vld [vmem:[%s4 + $0x20] sm:$0xff]
    %v463 = vld [vmem:[%s4 + $0x28] sm:$0xff]
    %v464 = vld [vmem:[%s4 + $0x30] sm:$0xff]
    %v465 = vld [vmem:[%s4 + $0x38] sm:$0xff]
    %v466 = vld [vmem:[%s4 + $0x40] sm:$0xff]
    %v467 = vld [vmem:[%s4 + $0x48] sm:$0xff]
    %v468 = vld [vmem:[%s4 + $0x50] sm:$0xff]
    %v469 = vld [vmem:[%s4 + $0x58] sm:$0xff]
    %v470 = vld [vmem:[%s4 + $0x60] sm:$0xff]
    %v471 = vld [vmem:[%s4 + $0x68] sm:$0xff]
    %v472 = vld [vmem:[%s4 + $0x70] sm:$0xff]
    %v473 = vld [vmem:[%s4 + $0x78] sm:$0xff]
    %vm474 = vcmask 261120
    %v476 = vsel %vm474, %v419, 0
    %478 = vmatpush.msra.mxu0 0.0
    %479 = vmatpush.msra.mxu0 0.0
    %480 = vmatpush.msra.mxu0 0.0
    %481 = vmatpush.msra.mxu0 0.0
    %482 = vmatpush.msra.mxu0 0.0
    %483 = vmatpush.msra.mxu0 0.0
    %484 = vmatpush.msra.mxu0 0.0
    %485 = vmatpush.msra.mxu0 0.0
    %486 = vmatpush.msra.mxu0 0.0
    %487 = vmatpush.msra.mxu0 0.0
    %488 = vmatpush.msra.mxu0 0.0
    %489 = vmatpush.msra.mxu0 0.0
    %490 = vmatpush.msra.mxu0 %v470
    %491 = vmatpush.msra.mxu0 %v466
    %492 = vmatpush.msra.mxu0 %v462
    %493 = vmatpush.msra.mxu0 %v458
    %494 = vmatmul.f32.gmra.mxu0 %v476
    %v495 = vpop.f32.mrf.mxu0
    %v496 = vadd.f32 0.0, %v495
    %497 = vdwg.mxu0
    %498 = vmatpush.msra.mxu0 0.0
    %499 = vmatpush.msra.mxu0 0.0
    %500 = vmatpush.msra.mxu0 0.0
    %501 = vmatpush.msra.mxu0 0.0
    %502 = vmatpush.msra.mxu0 0.0
    %503 = vmatpush.msra.mxu0 0.0
    %504 = vmatpush.msra.mxu0 0.0
    %505 = vmatpush.msra.mxu0 0.0
    %506 = vmatpush.msra.mxu0 0.0
    %507 = vmatpush.msra.mxu0 0.0
    %508 = vmatpush.msra.mxu0 0.0
    %509 = vmatpush.msra.mxu0 0.0
    %510 = vmatpush.msra.mxu0 %v471
    %511 = vmatpush.msra.mxu0 %v467
    %512 = vmatpush.msra.mxu0 %v463
    %513 = vmatpush.msra.mxu0 %v459
    %514 = vmatmul.f32.gmra.mxu0 %v476
    %v515 = vpop.f32.mrf.mxu0
    %v516 = vadd.f32 0.0, %v515
    %517 = vdwg.mxu0
    %518 = vmatpush.msra.mxu0 0.0
    %519 = vmatpush.msra.mxu0 0.0
    %520 = vmatpush.msra.mxu0 0.0
    %521 = vmatpush.msra.mxu0 0.0
    %522 = vmatpush.msra.mxu0 0.0
    %523 = vmatpush.msra.mxu0 0.0
    %524 = vmatpush.msra.mxu0 0.0
    %525 = vmatpush.msra.mxu0 0.0
    %526 = vmatpush.msra.mxu0 0.0
    %527 = vmatpush.msra.mxu0 0.0
    %528 = vmatpush.msra.mxu0 0.0
    %529 = vmatpush.msra.mxu0 0.0
    %530 = vmatpush.msra.mxu0 %v472
    %531 = vmatpush.msra.mxu0 %v468
    %532 = vmatpush.msra.mxu0 %v464
    %533 = vmatpush.msra.mxu0 %v460
    %534 = vmatmul.f32.gmra.mxu0 %v476
    %v535 = vpop.f32.mrf.mxu0
    %v536 = vadd.f32 0.0, %v535
    %537 = vdwg.mxu0
    %538 = vmatpush.msra.mxu0 0.0
    %539 = vmatpush.msra.mxu0 0.0
    %540 = vmatpush.msra.mxu0 0.0
    %541 = vmatpush.msra.mxu0 0.0
    %542 = vmatpush.msra.mxu0 0.0
    %543 = vmatpush.msra.mxu0 0.0
    %544 = vmatpush.msra.mxu0 0.0
    %545 = vmatpush.msra.mxu0 0.0
    %546 = vmatpush.msra.mxu0 0.0
    %547 = vmatpush.msra.mxu0 0.0
    %548 = vmatpush.msra.mxu0 0.0
    %549 = vmatpush.msra.mxu0 0.0
    %550 = vmatpush.msra.mxu0 %v473
    %551 = vmatpush.msra.mxu0 %v469
    %552 = vmatpush.msra.mxu0 %v465
    %553 = vmatpush.msra.mxu0 %v461
    %554 = vmatmul.f32.gmra.mxu0 %v476
    %v555 = vpop.f32.mrf.mxu0
    %v556 = vadd.f32 0.0, %v555
    %557 = vdwg.mxu0
    %v558 = vld [vmem:[%s3 + $0x5] sm:$0x1]
    %v559 = vperm.slane %v558, 0
    %v560 = vadd.f32 %v496, %v559
    %v561 = vld [vmem:[#allocation2] sm:$0xff]
    %v562 = vadd.f32 %v561, %v560
    %v563 = vld [vmem:[#allocation5] sm:$0xff]
    %v564 = vld [vmem:[#allocation5 + $0x8] sm:$0xff]
    %v565 = vld [vmem:[#allocation5 + $0x10] sm:$0xff]
    %v566 = vld [vmem:[#allocation5 + $0x18] sm:$0xff]
    %v567 = vld [vmem:[#allocation5 + $0x20] sm:$0xff]
    %v568 = vld [vmem:[#allocation5 + $0x28] sm:$0xff]
    %v570 = vsel %vm474, %v456, 0
    %572 = vmatpush.msra.mxu0 0.0
    %573 = vmatpush.msra.mxu0 0.0
    %574 = vmatpush.msra.mxu0 0.0
    %575 = vmatpush.msra.mxu0 0.0
    %576 = vmatpush.msra.mxu0 0.0
    %577 = vmatpush.msra.mxu0 0.0
    %578 = vmatpush.msra.mxu0 0.0
    %579 = vmatpush.msra.mxu0 0.0
    %580 = vmatpush.msra.mxu0 0.0
    %581 = vmatpush.msra.mxu0 0.0
    %582 = vmatpush.msra.mxu0 0.0
    %583 = vmatpush.msra.mxu0 0.0
    %584 = vmatpush.msra.mxu0 %v568
    %585 = vmatpush.msra.mxu0 %v567
    %586 = vmatpush.msra.mxu0 %v566
    %587 = vmatpush.msra.mxu0 %v565
    %588 = vmatmul.f32.gmra.mxu0 %v570
    %v589 = vpop.f32.mrf.mxu0
    %v590 = vadd.f32 0.0, %v589
    %591 = vdwg.mxu0
    %v593 = vsel %vm398, %v562, 0
    %595 = vmatpush.msra.mxu0 0.0
    %596 = vmatpush.msra.mxu0 0.0
    %597 = vmatpush.msra.mxu0 0.0
    %598 = vmatpush.msra.mxu0 0.0
    %599 = vmatpush.msra.mxu0 0.0
    %600 = vmatpush.msra.mxu0 0.0
    %601 = vmatpush.msra.mxu0 0.0
    %602 = vmatpush.msra.mxu0 0.0
    %603 = vmatpush.msra.mxu0 0.0
    %604 = vmatpush.msra.mxu0 0.0
    %605 = vmatpush.msra.mxu0 0.0
    %606 = vmatpush.msra.mxu0 0.0
    %607 = vmatpush.msra.mxu0 0.0
    %608 = vmatpush.msra.mxu0 0.0
    %609 = vmatpush.msra.mxu0 %v564
    %610 = vmatpush.msra.mxu0 %v563
    %611 = vmatmul.f32.gmra.mxu0 %v593
    %v612 = vpop.f32.mrf.mxu0
    %v613 = vadd.f32 %v590, %v612
    %614 = vdwg.mxu0
    %v615 = vld [vmem:[%s3 + $0x9] sm:$0x1]
    %v616 = vperm.slane %v615, 0
    %v617 = vadd.f32 %v613, %v616
    %v618 = vld [vmem:[%s3 + $0xe] sm:$0x1]
    %v619 = vld [vmem:[%s3 + $0x12] sm:$0x1]
    %v620 = vrot.slane %v617, 4
    %v621 = vadd.f32 %v617, %v620
    %v622 = vrot.slane %v621, 2
    %v623 = vadd.f32 %v621, %v622
    %v624 = vrot.slane %v623, 1
    %v625 = vadd.f32 %v623, %v624
    %v626 = vrcp.pop 8.0
    %v627 = vmul.f32 8.0, %v626
    %v628 = vsub.f32 1.0, %v627
    %v629 = vmul.f32 %v626, %v628
    %v630 = vadd.f32 %v626, %v629
    %vm631 = vweird.f32 %v626
    %v632 = vsel %vm631, %v626, %v630
    %v633 = vmul.f32 %v625, %v632
    %v634 = vmul.f32 %v617, %v617
    %v635 = vrot.slane %v634, 4
    %v636 = vadd.f32 %v634, %v635
    %v637 = vrot.slane %v636, 2
    %v638 = vadd.f32 %v636, %v637
    %v639 = vrot.slane %v638, 1
    %v640 = vadd.f32 %v638, %v639
    %v641 = vmul.f32 %v640, %v632
    %v642 = vmul.f32 %v633, %v633
    %v643 = vsub.f32 %v641, %v642
    %v644 = vmax.f32 %v643, 0.0
    %v645 = vsub.f32 %v617, %v633
    %v646 = vadd.f32 %v644, 1e-05
    %v647 = vrsqrt.pop %v646
    %v648 = vmul.f32 %v647, %v646
    %v649 = vmul.f32 %v648, %v647
    %v650 = vmul.f32 0.5, %v649
    %v651 = vsub.f32 1.5, %v650
    %v652 = vmul.f32 %v647, %v651
    %vm653 = vweird.f32 %v646
    %vm654 = vweird.f32 %v647
    %vm655 = vmor %vm653, %vm654
    %v656 = vsel %vm655, %v647, %v652
    %v657 = vmul.f32 %v645, %v656
    %v658 = vperm.slane %v618, 0
    %v659 = vmul.f32 %v657, %v658
    %v660 = vperm.slane %v619, 0
    %v661 = vadd.f32 %v659, %v660
    %v662 = vmax.f32 %v661, 0.0
    %v663 = vld [vmem:[%s3 + $0x6] sm:$0x1]
    %v664 = vperm.slane %v663, 0
    %v665 = vadd.f32 %v516, %v664
    %v666 = vadd.f32 %v662, %v665
    %v667 = vld [vmem:[#allocation7] sm:$0xff]
    %v668 = vld [vmem:[#allocation7 + $0x8] sm:$0xff]
    %v669 = vld [vmem:[#allocation7 + $0x10] sm:$0xff]
    %v670 = vld [vmem:[#allocation7 + $0x18] sm:$0xff]
    %v671 = vld [vmem:[#allocation7 + $0x20] sm:$0xff]
    %v672 = vld [vmem:[#allocation7 + $0x28] sm:$0xff]
    %v673 = vld [vmem:[#allocation7 + $0x30] sm:$0xff]
    %v674 = vld [vmem:[#allocation7 + $0x38] sm:$0xff]
    %v675 = vld [vmem:[#allocation7 + $0x40] sm:$0xff]
    %v676 = vld [vmem:[#allocation7 + $0x48] sm:$0xff]
    %v677 = vld [vmem:[#allocation7 + $0x50] sm:$0xff]
    %v678 = vld [vmem:[#allocation7 + $0x58] sm:$0xff]
    %v679 = vld [vmem:[#allocation7 + $0x60] sm:$0xff]
    %v680 = vld [vmem:[#allocation7 + $0x68] sm:$0xff]
    %v681 = vld [vmem:[#allocation7 + $0x70] sm:$0xff]
    %v682 = vld [vmem:[#allocation7 + $0x78] sm:$0xff]
    %v683 = vld [vmem:[%s3 + $0xa] sm:$0x1]
    %v684 = vperm.slane %v683, 0
    %685 = vmatpush.msra.mxu0 %v682
    %686 = vmatpush.msra.mxu0 %v681
    %687 = vmatpush.msra.mxu0 %v680
    %688 = vmatpush.msra.mxu0 %v679
    %689 = vmatpush.msra.mxu0 %v678
    %690 = vmatpush.msra.mxu0 %v677
    %691 = vmatpush.msra.mxu0 %v676
    %692 = vmatpush.msra.mxu0 %v675
    %693 = vmatpush.msra.mxu0 %v674
    %694 = vmatpush.msra.mxu0 %v673
    %695 = vmatpush.msra.mxu0 %v672
    %696 = vmatpush.msra.mxu0 %v671
    %697 = vmatpush.msra.mxu0 %v670
    %698 = vmatpush.msra.mxu0 %v669
    %699 = vmatpush.msra.mxu0 %v668
    %700 = vmatpush.msra.mxu0 %v667
    %701 = vmatmul.f32.gmra.mxu0 %v666
    %v702 = vpop.f32.mrf.mxu0
    %v703 = vadd.f32 %v684, %v702
    %704 = vdwg.mxu0
    %v705 = vld [vmem:[%s3 + $0xf] sm:$0x1]
    %v706 = vld [vmem:[%s3 + $0x13] sm:$0x1]
    %v707 = vrot.slane %v703, 4
    %v708 = vadd.f32 %v703, %v707
    %v709 = vrot.slane %v708, 2
    %v710 = vadd.f32 %v708, %v709
    %v711 = vrot.slane %v710, 1
    %v712 = vadd.f32 %v710, %v711
    %v713 = vmul.f32 %v712, %v632
    %v714 = vmul.f32 %v703, %v703
    %v715 = vrot.slane %v714, 4
    %v716 = vadd.f32 %v714, %v715
    %v717 = vrot.slane %v716, 2
    %v718 = vadd.f32 %v716, %v717
    %v719 = vrot.slane %v718, 1
    %v720 = vadd.f32 %v718, %v719
    %v721 = vmul.f32 %v720, %v632
    %v722 = vmul.f32 %v713, %v713
    %v723 = vsub.f32 %v721, %v722
    %v724 = vmax.f32 %v723, 0.0
    %v725 = vsub.f32 %v703, %v713
    %v726 = vadd.f32 %v724, 1e-05
    %v727 = vrsqrt.pop %v726
    %v728 = vmul.f32 %v727, %v726
    %v729 = vmul.f32 %v728, %v727
    %v730 = vmul.f32 0.5, %v729
    %v731 = vsub.f32 1.5, %v730
    %v732 = vmul.f32 %v727, %v731
    %vm733 = vweird.f32 %v726
    %vm734 = vweird.f32 %v727
    %vm735 = vmor %vm733, %vm734
    %v736 = vsel %vm735, %v727, %v732
    %v737 = vmul.f32 %v725, %v736
    %v738 = vperm.slane %v705, 0
    %v739 = vmul.f32 %v737, %v738
    %v740 = vperm.slane %v706, 0
    %v741 = vadd.f32 %v739, %v740
    %v742 = vmax.f32 %v741, 0.0
    %v743 = vadd.f32 %v662, %v742
    %v744 = vld [vmem:[%s3 + $0x7] sm:$0x1]
    %v745 = vperm.slane %v744, 0
    %v746 = vadd.f32 %v536, %v745
    %v747 = vadd.f32 %v743, %v746
    %s748 = scalar_lea.vmem [#allocation7], 128
    %v749 = vld [vmem:[%s748] sm:$0xff]
    %v750 = vld [vmem:[%s748 + $0x8] sm:$0xff]
    %v751 = vld [vmem:[%s748 + $0x10] sm:$0xff]
    %v752 = vld [vmem:[%s748 + $0x18] sm:$0xff]
    %v753 = vld [vmem:[%s748 + $0x20] sm:$0xff]
    %v754 = vld [vmem:[%s748 + $0x28] sm:$0xff]
    %v755 = vld [vmem:[%s748 + $0x30] sm:$0xff]
    %v756 = vld [vmem:[%s748 + $0x38] sm:$0xff]
    %v757 = vld [vmem:[%s748 + $0x40] sm:$0xff]
    %v758 = vld [vmem:[%s748 + $0x48] sm:$0xff]
    %v759 = vld [vmem:[%s748 + $0x50] sm:$0xff]
    %v760 = vld [vmem:[%s748 + $0x58] sm:$0xff]
    %v761 = vld [vmem:[%s748 + $0x60] sm:$0xff]
    %v762 = vld [vmem:[%s748 + $0x68] sm:$0xff]
    %v763 = vld [vmem:[%s748 + $0x70] sm:$0xff]
    %v764 = vld [vmem:[%s748 + $0x78] sm:$0xff]
    %v765 = vld [vmem:[%s3 + $0xb] sm:$0x1]
    %v766 = vperm.slane %v765, 0
    %767 = vmatpush.msra.mxu0 %v764
    %768 = vmatpush.msra.mxu0 %v763
    %769 = vmatpush.msra.mxu0 %v762
    %770 = vmatpush.msra.mxu0 %v761
    %771 = vmatpush.msra.mxu0 %v760
    %772 = vmatpush.msra.mxu0 %v759
    %773 = vmatpush.msra.mxu0 %v758
    %774 = vmatpush.msra.mxu0 %v757
    %775 = vmatpush.msra.mxu0 %v756
    %776 = vmatpush.msra.mxu0 %v755
    %777 = vmatpush.msra.mxu0 %v754
    %778 = vmatpush.msra.mxu0 %v753
    %779 = vmatpush.msra.mxu0 %v752
    %780 = vmatpush.msra.mxu0 %v751
    %781 = vmatpush.msra.mxu0 %v750
    %782 = vmatpush.msra.mxu0 %v749
    %783 = vmatmul.f32.gmra.mxu0 %v747
    %v784 = vpop.f32.mrf.mxu0
    %v785 = vadd.f32 %v766, %v784
    %786 = vdwg.mxu0
    %v787 = vld [vmem:[%s3 + $0x10] sm:$0x1]
    %v788 = vld [vmem:[%s3 + $0x14] sm:$0x1]
    %v789 = vrot.slane %v785, 4
    %v790 = vadd.f32 %v785, %v789
    %v791 = vrot.slane %v790, 2
    %v792 = vadd.f32 %v790, %v791
    %v793 = vrot.slane %v792, 1
    %v794 = vadd.f32 %v792, %v793
    %v795 = vmul.f32 %v794, %v632
    %v796 = vmul.f32 %v785, %v785
    %v797 = vrot.slane %v796, 4
    %v798 = vadd.f32 %v796, %v797
    %v799 = vrot.slane %v798, 2
    %v800 = vadd.f32 %v798, %v799
    %v801 = vrot.slane %v800, 1
    %v802 = vadd.f32 %v800, %v801
    %v803 = vmul.f32 %v802, %v632
    %v804 = vmul.f32 %v795, %v795
    %v805 = vsub.f32 %v803, %v804
    %v806 = vmax.f32 %v805, 0.0
    %v807 = vsub.f32 %v785, %v795
    %v808 = vadd.f32 %v806, 1e-05
    %v809 = vrsqrt.pop %v808
    %v810 = vmul.f32 %v809, %v808
    %v811 = vmul.f32 %v810, %v809
    %v812 = vmul.f32 0.5, %v811
    %v813 = vsub.f32 1.5, %v812
    %v814 = vmul.f32 %v809, %v813
    %vm815 = vweird.f32 %v808
    %vm816 = vweird.f32 %v809
    %vm817 = vmor %vm815, %vm816
    %v818 = vsel %vm817, %v809, %v814
    %v819 = vmul.f32 %v807, %v818
    %v820 = vperm.slane %v787, 0
    %v821 = vmul.f32 %v819, %v820
    %v822 = vperm.slane %v788, 0
    %v823 = vadd.f32 %v821, %v822
    %v824 = vmax.f32 %v823, 0.0
    %v825 = vadd.f32 %v743, %v824
    %v826 = vld [vmem:[%s3 + $0x8] sm:$0x1]
    %v827 = vperm.slane %v826, 0
    %v828 = vadd.f32 %v556, %v827
    %v829 = vadd.f32 %v825, %v828
    %s830 = scalar_lea.vmem [#allocation7], 256
    %v831 = vld [vmem:[%s830] sm:$0xff]
    %v832 = vld [vmem:[%s830 + $0x8] sm:$0xff]
    %v833 = vld [vmem:[%s830 + $0x10] sm:$0xff]
    %v834 = vld [vmem:[%s830 + $0x18] sm:$0xff]
    %v835 = vld [vmem:[%s830 + $0x20] sm:$0xff]
    %v836 = vld [vmem:[%s830 + $0x28] sm:$0xff]
    %v837 = vld [vmem:[%s830 + $0x30] sm:$0xff]
    %v838 = vld [vmem:[%s830 + $0x38] sm:$0xff]
    %v839 = vld [vmem:[%s830 + $0x40] sm:$0xff]
    %v840 = vld [vmem:[%s830 + $0x48] sm:$0xff]
    %v841 = vld [vmem:[%s830 + $0x50] sm:$0xff]
    %v842 = vld [vmem:[%s830 + $0x58] sm:$0xff]
    %v843 = vld [vmem:[%s830 + $0x60] sm:$0xff]
    %v844 = vld [vmem:[%s830 + $0x68] sm:$0xff]
    %v845 = vld [vmem:[%s830 + $0x70] sm:$0xff]
    %v846 = vld [vmem:[%s830 + $0x78] sm:$0xff]
    %v847 = vld [vmem:[%s3 + $0xc] sm:$0x1]
    %v848 = vperm.slane %v847, 0
    %849 = vmatpush.msra.mxu0 %v846
    %850 = vmatpush.msra.mxu0 %v845
    %851 = vmatpush.msra.mxu0 %v844
    %852 = vmatpush.msra.mxu0 %v843
    %853 = vmatpush.msra.mxu0 %v842
    %854 = vmatpush.msra.mxu0 %v841
    %855 = vmatpush.msra.mxu0 %v840
    %856 = vmatpush.msra.mxu0 %v839
    %857 = vmatpush.msra.mxu0 %v838
    %858 = vmatpush.msra.mxu0 %v837
    %859 = vmatpush.msra.mxu0 %v836
    %860 = vmatpush.msra.mxu0 %v835
    %861 = vmatpush.msra.mxu0 %v834
    %862 = vmatpush.msra.mxu0 %v833
    %863 = vmatpush.msra.mxu0 %v832
    %864 = vmatpush.msra.mxu0 %v831
    %865 = vmatmul.f32.gmra.mxu0 %v829
    %v866 = vpop.f32.mrf.mxu0
    %v867 = vadd.f32 %v848, %v866
    %868 = vdwg.mxu0
    %v869 = vld [vmem:[%s3 + $0x11] sm:$0x1]
    %v870 = vld [vmem:[%s3 + $0x15] sm:$0x1]
    %v871 = vrot.slane %v867, 4
    %v872 = vadd.f32 %v867, %v871
    %v873 = vrot.slane %v872, 2
    %v874 = vadd.f32 %v872, %v873
    %v875 = vrot.slane %v874, 1
    %v876 = vadd.f32 %v874, %v875
    %v877 = vmul.f32 %v876, %v632
    %v878 = vmul.f32 %v867, %v867
    %v879 = vrot.slane %v878, 4
    %v880 = vadd.f32 %v878, %v879
    %v881 = vrot.slane %v880, 2
    %v882 = vadd.f32 %v880, %v881
    %v883 = vrot.slane %v882, 1
    %v884 = vadd.f32 %v882, %v883
    %v885 = vmul.f32 %v884, %v632
    %v886 = vmul.f32 %v877, %v877
    %v887 = vsub.f32 %v885, %v886
    %v888 = vmax.f32 %v887, 0.0
    %v889 = vsub.f32 %v867, %v877
    %v890 = vadd.f32 %v888, 1e-05
    %v891 = vrsqrt.pop %v890
    %v892 = vmul.f32 %v891, %v890
    %v893 = vmul.f32 %v892, %v891
    %v894 = vmul.f32 0.5, %v893
    %v895 = vsub.f32 1.5, %v894
    %v896 = vmul.f32 %v891, %v895
    %vm897 = vweird.f32 %v890
    %vm898 = vweird.f32 %v891
    %vm899 = vmor %vm897, %vm898
    %v900 = vsel %vm899, %v891, %v896
    %v901 = vmul.f32 %v889, %v900
    %v902 = vperm.slane %v869, 0
    %v903 = vmul.f32 %v901, %v902
    %v904 = vperm.slane %v870, 0
    %v905 = vadd.f32 %v903, %v904
    %v906 = vmax.f32 %v905, 0.0
    %v907 = vadd.f32 %v825, %v906
    %v908 = vld [vmem:[%s7] sm:$0xff]
    %v909 = vld [vmem:[%s7 + $0x8] sm:$0xff]
    %v910 = vld [vmem:[%s7 + $0x10] sm:$0xff]
    %v911 = vld [vmem:[%s7 + $0x18] sm:$0xff]
    %v912 = vld [vmem:[%s7 + $0x20] sm:$0xff]
    %v913 = vld [vmem:[%s7 + $0x28] sm:$0xff]
    %v914 = vld [vmem:[%s7 + $0x30] sm:$0xff]
    %v915 = vld [vmem:[%s7 + $0x38] sm:$0xff]
    %v916 = vld [vmem:[%s7 + $0x40] sm:$0xff]
    %v917 = vld [vmem:[%s7 + $0x48] sm:$0xff]
    %v918 = vld [vmem:[%s7 + $0x50] sm:$0xff]
    %v919 = vld [vmem:[%s7 + $0x58] sm:$0xff]
    %v920 = vld [vmem:[%s7 + $0x60] sm:$0xff]
    %v921 = vld [vmem:[%s7 + $0x68] sm:$0xff]
    %v922 = vld [vmem:[%s7 + $0x70] sm:$0xff]
    %v923 = vld [vmem:[%s7 + $0x78] sm:$0xff]
    %v924 = vld [vmem:[%s3 + $0xd] sm:$0x1]
    %v925 = vperm.slane %v924, 0
    %926 = vmatpush.msra.mxu0 %v923
    %927 = vmatpush.msra.mxu0 %v922
    %928 = vmatpush.msra.mxu0 %v921
    %929 = vmatpush.msra.mxu0 %v920
    %930 = vmatpush.msra.mxu0 %v919
    %931 = vmatpush.msra.mxu0 %v918
    %932 = vmatpush.msra.mxu0 %v917
    %933 = vmatpush.msra.mxu0 %v916
    %934 = vmatpush.msra.mxu0 %v915
    %935 = vmatpush.msra.mxu0 %v914
    %936 = vmatpush.msra.mxu0 %v913
    %937 = vmatpush.msra.mxu0 %v912
    %938 = vmatpush.msra.mxu0 %v911
    %939 = vmatpush.msra.mxu0 %v910
    %940 = vmatpush.msra.mxu0 %v909
    %941 = vmatpush.msra.mxu0 %v908
    %942 = vmatmul.f32.gmra.mxu0 %v907
    %v943 = vpop.f32.mrf.mxu0
    %v944 = vadd.f32 %v925, %v943
    %945 = vdwg.mxu0
    %946 = vst.msk [vmem:[#allocation8] sm:$0xff] %vm398, %v944
    // Predicated region
    $region46: #{tpu_custom_call.1} parent=1 // pred_check
      _
    $region47: #{tpu_custom_call.1} parent=1 // pred_check_branch
      %948 = sbr.rel (0) target = $region49
    $region48: #{tpu_custom_call.1} parent=1 // pred_region
      %950 = vsyncadd [#allocation4], 0
      %s952 = sshll.u32 [#allocation8], 4
      %s953 = int_to_ptr.vmem [resolvable:$true] %s952
      %s954 = sshll.u32 %s8, 4
      %s955 = int_to_ptr.hbm [resolvable:$true] %s954
      %957 = dma.vmem_to_hbm [thread:$0]  %s953, 128, %s955, [#allocation4]
    $region49: #{tpu_custom_call.1} parent=1 // pred_fallthru
      _
    // Predicated region
    $region50: #{tpu_custom_call.1} parent=1 // pred_check
      _
    $region51: #{tpu_custom_call.1} parent=1 // pred_check_branch
      %959 = sbr.rel (0) target = $region53
    $region52: #{tpu_custom_call.1} parent=1 // pred_region
      %961 = dma.done [#allocation4], 128
    $region53: #{tpu_custom_call.1} parent=1 // pred_fallthru
      _
    %962 = vsyncpa [#allocation3], 1
    %963 = vsyncpa [#allocation6], 1
    %964 = vsyncpa [#allocation4], 1

</llo_original>
